<compile_context>
chip_gen: v5e
topology: v5e:2x2
jax: 0.10.0
libtpu: 0.0.40
codegen_flags: <defaults>
</compile_context>

<pallas_src>
import jax
import jax.numpy as jnp
from jax import lax
from jax.experimental import pallas as pl
from jax.experimental.pallas import tpu as pltpu


def _fused_recommender_kernel(ids_ref, u1_ref, p1_ref, b1_ref,
                              w2_ref, b2_ref, w3_ref, b3_ref, o_ref):
    tile_b = ids_ref.shape[0]
    n_users = u1_ref.shape[0]
    n_posts = p1_ref.shape[0]

    ids = ids_ref[...]                                     # (TILE_B, 2) int32
    uids = ids[:, 0:1]                                     # (TILE_B, 1)
    pids = ids[:, 1:2]

    # ---- embedding gather (exact one-hot, bf16 MXU) with fc1 folded in ----
    onehot_u = (lax.broadcasted_iota(jnp.int32, (tile_b, n_users), 1)
                == uids).astype(jnp.bfloat16)              # (TILE_B, NU)
    onehot_p = (lax.broadcasted_iota(jnp.int32, (tile_b, n_posts), 1)
                == pids).astype(jnp.bfloat16)              # (TILE_B, NP)

    # h1 = onehot_u @ (Eu @ W1u) + onehot_p @ (Ep @ W1p) + b1   (f32 accumulate)
    h1 = (jnp.dot(onehot_u, u1_ref[...], preferred_element_type=jnp.float32)
          + jnp.dot(onehot_p, p1_ref[...], preferred_element_type=jnp.float32)
          + b1_ref[...])
    h1 = jnp.maximum(h1, 0.0)                              # ReLU in f32 (VPU)

    # ---- fc2 (output lane-padded 64 -> 128 so h2 vregs are lane-dense) ----
    h2 = jnp.dot(h1.astype(jnp.bfloat16), w2_ref[...],
                 preferred_element_type=jnp.float32) + b2_ref[...]
    h2 = jnp.maximum(h2, 0.0)                              # (TILE_B, 128) f32

    # ---- fc3 directly in lane-major layout: (1,128) . (TILE_B,128)^T ----
    z = lax.dot_general(w3_ref[...], h2.astype(jnp.bfloat16),
                        (((1,), (1,)), ((), ())),
                        preferred_element_type=jnp.float32)   # (1, TILE_B)
    z = z + b3_ref[...]
    o_ref[0] = jax.nn.sigmoid(z)                           # lane-dense store


def recommender_forward(user_ids, post_ids, packed, *, tile_b=2048):
    """Fused gather + MLP forward. Returns (B, 1) scores in f32."""
    n_users, h = packed["u1"].shape
    n_posts, _ = packed["p1"].shape

    b = user_ids.shape[0]
    # Big tiles amortize per-grid-step overhead; keep >= 2 steps so the
    # "parallel" axis can shard across v7x's dual TensorCores.
    tile_b = max(128, (min(tile_b,
                           pl.next_power_of_2(max(1, pl.cdiv(b, 2)))) // 128) * 128)
    num_tiles = max(2, pl.cdiv(b, tile_b))
    b_pad = num_tiles * tile_b

    ids = jnp.stack([user_ids.astype(jnp.int32),
                     post_ids.astype(jnp.int32)], axis=1)          # (b, 2)
    ids = jnp.pad(ids, ((0, b_pad - b), (0, 0)))                   # pad rows: id 0

    resident = lambda i: (0, 0)    # same block every grid step -> stays in VMEM
    batched = lambda i: (i, 0)

    def nbytes(x):
        return x.size * x.dtype.itemsize

    table_bytes = sum(nbytes(packed[k]) for k in
                      ("u1", "p1", "b1", "w2", "b2", "w3", "b3"))
    cost = pl.CostEstimate(
        flops=2 * b_pad * (n_users * h + n_posts * h + h * h + h),
        transcendentals=b_pad,
        bytes_accessed=b_pad * 2 * 4 + table_bytes + b_pad * 4,
    )

    out3 = pl.pallas_call(
        _fused_recommender_kernel,
        out_shape=jax.ShapeDtypeStruct((num_tiles, 1, tile_b), jnp.float32),
        grid=(num_tiles,),
        in_specs=[
            pl.BlockSpec((tile_b, 2), batched),        # [uid | pid] int32
            pl.BlockSpec((n_users, h), resident),      # U1 = Eu @ W1u (bf16)
            pl.BlockSpec((n_posts, h), resident),      # P1 = Ep @ W1p (bf16)
            pl.BlockSpec((1, h), resident),            # b1 (f32)
            pl.BlockSpec((h, h), resident),            # w2 lane-padded (bf16)
            pl.BlockSpec((1, h), resident),            # b2 lane-padded (f32)
            pl.BlockSpec((1, h), resident),            # w3 padded row (bf16)
            pl.BlockSpec((1, 1), resident),            # b3 (f32)
        ],
        out_specs=pl.BlockSpec((1, 1, tile_b), lambda i: (i, 0, 0)),
        compiler_params=pltpu.CompilerParams(
            dimension_semantics=("parallel",),         # megacore / v7x dual-TC
            # 32 MiB scoped VMEM is ample even at tile_b=2048 (activations are
            # a few MiB); if ever raised for large resident tables, cap well
            # below 64 MiB on v7x (<= 48 MiB); v5e/v6e (128 MiB) can go higher.
            vmem_limit_bytes=32 * 1024 * 1024,
        ),
        cost_estimate=cost,
    )(ids, packed["u1"], packed["p1"], packed["b1"],
      packed["w2"], packed["b2"], packed["w3"], packed["b3"])

    return out3.reshape(b_pad, 1)[:b]


def init_params(key, num_users, num_posts, embedding_dim=64):
    """Raw params matching the PyTorch module (w stored as (in, out))."""
    ks = jax.random.split(key, 8)

    def uniform(k, shape, bound):
        return jax.random.uniform(k, shape, jnp.float32, -bound, bound)

    e = embedding_dim
    return {
        "user_embedding": jax.random.normal(ks[0], (num_users, e), jnp.float32),
        "post_embedding": jax.random.normal(ks[1], (num_posts, e), jnp.float32),
        "w1": uniform(ks[2], (2 * e, 128), (2 * e) ** -0.5),
        "b1": uniform(ks[3], (1, 128), (2 * e) ** -0.5),
        "w2": uniform(ks[4], (128, 64), 128 ** -0.5),
        "b2": uniform(ks[5], (1, 64), 128 ** -0.5),
        "w3": uniform(ks[6], (64, 1), 64 ** -0.5),
        "b3": uniform(ks[7], (1, 1), 64 ** -0.5),
    }


def pack_params(params):
    """Host-side packing: fold fc1 into the gather tables, lane-pad fc2/fc3,
    cast MXU operands to bf16."""
    e = params["user_embedding"].shape[1]
    n2 = params["w2"].shape[1]                       # 64
    w1u, w1p = params["w1"][:e], params["w1"][e:]
    w2p = jnp.zeros((128, 128), jnp.float32).at[:, :n2].set(params["w2"])
    b2p = jnp.zeros((1, 128), jnp.float32).at[:, :n2].set(params["b2"])
    w3row = jnp.zeros((1, 128), jnp.float32).at[0, :n2].set(params["w3"][:, 0])
    return {
        "u1": (params["user_embedding"] @ w1u).astype(jnp.bfloat16),  # (NU, 128)
        "p1": (params["post_embedding"] @ w1p).astype(jnp.bfloat16),  # (NP, 128)
        "b1": params["b1"],
        "w2": w2p.astype(jnp.bfloat16),
        "b2": b2p,
        "w3": w3row.astype(jnp.bfloat16),
        "b3": params["b3"],
    }


if __name__ == "__main__":
    key = jax.random.PRNGKey(0)
    num_users, num_posts, embedding_dim = 16, 32, 64
    batch = 8

    params = init_params(key, num_users, num_posts, embedding_dim)
    packed = pack_params(params)

    k_u, k_p = jax.random.split(jax.random.PRNGKey(1))
    user_ids = jax.random.randint(k_u, (batch,), 0, num_users, dtype=jnp.int32)
    post_ids = jax.random.randint(k_p, (batch,), 0, num_posts, dtype=jnp.int32)

    out = recommender_forward(user_ids, post_ids, packed)
    out = jax.block_until_ready(out)

    # Pure-JAX f32 reference (PyTorch semantics).
    ue = jnp.take(params["user_embedding"], user_ids, axis=0)
    pe = jnp.take(params["post_embedding"], post_ids, axis=0)
    x = jnp.concatenate([ue, pe], axis=1)
    h1 = jnp.maximum(x @ params["w1"] + params["b1"], 0.0)
    h2 = jnp.maximum(h1 @ params["w2"] + params["b2"], 0.0)
    ref = jax.nn.sigmoid(h2 @ params["w3"] + params["b3"])

    assert out.shape == (batch, 1)
    # bf16 MXU operands (tables + weights) => loose tolerance vs f32 reference.
    assert jnp.allclose(out, ref, atol=2e-2, rtol=2e-2), \
        float(jnp.max(jnp.abs(out - ref)))

    print("KERNEL_OK")
</pallas_src>

<mosaic_0001>
module attributes {stable_mosaic.version = 11 : i64} {
  func.func @_fused_recommender_kernel(%arg0: i32, %arg1: memref<128x2xi32, #tpu.memory_space<vmem>>, %arg2: memref<16x128xbf16, #tpu.memory_space<vmem>>, %arg3: memref<32x128xbf16, #tpu.memory_space<vmem>>, %arg4: memref<1x128xf32, #tpu.memory_space<vmem>>, %arg5: memref<128x128xbf16, #tpu.memory_space<vmem>>, %arg6: memref<1x128xf32, #tpu.memory_space<vmem>>, %arg7: memref<1x128xbf16, #tpu.memory_space<vmem>>, %arg8: memref<1x1xf32, #tpu.memory_space<vmem>>, %arg9: memref<1x1x128xf32, #tpu.memory_space<vmem>>) attributes {dimension_semantics = [#tpu.dimension_semantics<parallel>], iteration_bounds = array<i64: 2>, scalar_prefetch = 0 : i64, scratch_operands = 0 : i64, tpu.core_type = #tpu.core_type<tc>, window_params = [{transform_indices = @transform_0, window_bounds = array<i64: 128, 2>}, {pipeline_mode = #tpu.pipeline_mode<synchronous>, transform_indices = @transform_1, window_bounds = array<i64: 16, 128>}, {pipeline_mode = #tpu.pipeline_mode<synchronous>, transform_indices = @transform_2, window_bounds = array<i64: 32, 128>}, {pipeline_mode = #tpu.pipeline_mode<synchronous>, transform_indices = @transform_3, window_bounds = array<i64: 1, 128>}, {pipeline_mode = #tpu.pipeline_mode<synchronous>, transform_indices = @transform_4, window_bounds = array<i64: 128, 128>}, {pipeline_mode = #tpu.pipeline_mode<synchronous>, transform_indices = @transform_5, window_bounds = array<i64: 1, 128>}, {pipeline_mode = #tpu.pipeline_mode<synchronous>, transform_indices = @transform_6, window_bounds = array<i64: 1, 128>}, {pipeline_mode = #tpu.pipeline_mode<synchronous>, transform_indices = @transform_7, window_bounds = array<i64: 1, 1>}, {transform_indices = @transform_8, window_bounds = array<i64: 1, 1, 128>}]} {
    %c0 = arith.constant 0 : index
    %c0_0 = arith.constant 0 : index
    %0 = vector.load %arg1[%c0, %c0_0] : memref<128x2xi32, #tpu.memory_space<vmem>>, vector<128x2xi32>
    %1 = vector.extract_strided_slice %0 {offsets = [0, 0], sizes = [128, 1], strides = [1, 1]} : vector<128x2xi32> to vector<128x1xi32>
    %2 = vector.extract_strided_slice %0 {offsets = [0, 1], sizes = [128, 1], strides = [1, 1]} : vector<128x2xi32> to vector<128x1xi32>
    %3 = tpu.iota {dimensions = array<i32: 1>} : vector<128x16xi32>
    %4 = vector.broadcast %1 : vector<128x1xi32> to vector<128x16xi32>
    %5 = arith.cmpi eq, %3, %4 : vector<128x16xi32>
    %6 = arith.extui %5 : vector<128x16xi1> to vector<128x16xi32>
    %7 = arith.sitofp %6 : vector<128x16xi32> to vector<128x16xf32>
    %8 = arith.truncf %7 : vector<128x16xf32> to vector<128x16xbf16>
    %9 = tpu.iota {dimensions = array<i32: 1>} : vector<128x32xi32>
    %10 = vector.broadcast %2 : vector<128x1xi32> to vector<128x32xi32>
    %11 = arith.cmpi eq, %9, %10 : vector<128x32xi32>
    %12 = arith.extui %11 : vector<128x32xi1> to vector<128x32xi32>
    %13 = arith.sitofp %12 : vector<128x32xi32> to vector<128x32xf32>
    %14 = arith.truncf %13 : vector<128x32xf32> to vector<128x32xbf16>
    %c0_1 = arith.constant 0 : index
    %c0_2 = arith.constant 0 : index
    %15 = vector.load %arg2[%c0_1, %c0_2] : memref<16x128xbf16, #tpu.memory_space<vmem>>, vector<16x128xbf16>
    %cst = arith.constant dense<0.000000e+00> : vector<128x128xf32>
    %16 = tpu.matmul %8, %15, %cst {dimension_numbers = #tpu.dot_dimension_numbers<[1], [0], [0], [1], [0, 0, 1, 1], [], []>} : vector<128x16xbf16>, vector<16x128xbf16>, vector<128x128xf32> -> vector<128x128xf32>
    %c0_3 = arith.constant 0 : index
    %c0_4 = arith.constant 0 : index
    %17 = vector.load %arg3[%c0_3, %c0_4] : memref<32x128xbf16, #tpu.memory_space<vmem>>, vector<32x128xbf16>
    %cst_5 = arith.constant dense<0.000000e+00> : vector<128x128xf32>
    %18 = tpu.matmul %14, %17, %cst_5 {dimension_numbers = #tpu.dot_dimension_numbers<[1], [0], [0], [1], [0, 0, 1, 1], [], []>} : vector<128x32xbf16>, vector<32x128xbf16>, vector<128x128xf32> -> vector<128x128xf32>
    %19 = arith.addf %16, %18 : vector<128x128xf32>
    %c0_6 = arith.constant 0 : index
    %c0_7 = arith.constant 0 : index
    %20 = vector.load %arg4[%c0_6, %c0_7] : memref<1x128xf32, #tpu.memory_space<vmem>>, vector<1x128xf32>
    %21 = vector.broadcast %20 : vector<1x128xf32> to vector<128x128xf32>
    %22 = arith.addf %19, %21 : vector<128x128xf32>
    %cst_8 = arith.constant 0.000000e+00 : f32
    %23 = vector.broadcast %cst_8 : f32 to vector<128x128xf32>
    %24 = arith.maximumf %22, %23 : vector<128x128xf32>
    %25 = arith.truncf %24 : vector<128x128xf32> to vector<128x128xbf16>
    %c0_9 = arith.constant 0 : index
    %c0_10 = arith.constant 0 : index
    %26 = vector.load %arg5[%c0_9, %c0_10] : memref<128x128xbf16, #tpu.memory_space<vmem>>, vector<128x128xbf16>
    %cst_11 = arith.constant dense<0.000000e+00> : vector<128x128xf32>
    %27 = tpu.matmul %25, %26, %cst_11 {dimension_numbers = #tpu.dot_dimension_numbers<[1], [0], [0], [1], [0, 0, 1, 1], [], []>} : vector<128x128xbf16>, vector<128x128xbf16>, vector<128x128xf32> -> vector<128x128xf32>
    %c0_12 = arith.constant 0 : index
    %c0_13 = arith.constant 0 : index
    %28 = vector.load %arg6[%c0_12, %c0_13] : memref<1x128xf32, #tpu.memory_space<vmem>>, vector<1x128xf32>
    %29 = vector.broadcast %28 : vector<1x128xf32> to vector<128x128xf32>
    %30 = arith.addf %27, %29 : vector<128x128xf32>
    %cst_14 = arith.constant 0.000000e+00 : f32
    %31 = vector.broadcast %cst_14 : f32 to vector<128x128xf32>
    %32 = arith.maximumf %30, %31 : vector<128x128xf32>
    %c0_15 = arith.constant 0 : index
    %c0_16 = arith.constant 0 : index
    %33 = vector.load %arg7[%c0_15, %c0_16] : memref<1x128xbf16, #tpu.memory_space<vmem>>, vector<1x128xbf16>
    %34 = arith.truncf %32 : vector<128x128xf32> to vector<128x128xbf16>
    %cst_17 = arith.constant dense<0.000000e+00> : vector<1x128xf32>
    %35 = tpu.matmul %33, %34, %cst_17 {dimension_numbers = #tpu.dot_dimension_numbers<[1], [1], [0], [0], [0, 0, 1, 0], [], []>} : vector<1x128xbf16>, vector<128x128xbf16>, vector<1x128xf32> -> vector<1x128xf32>
    %c0_18 = arith.constant 0 : index
    %c0_19 = arith.constant 0 : index
    %36 = vector.load %arg8[%c0_18, %c0_19] : memref<1x1xf32, #tpu.memory_space<vmem>>, vector<1x1xf32>
    %37 = vector.broadcast %36 : vector<1x1xf32> to vector<1x128xf32>
    %38 = arith.addf %35, %37 : vector<1x128xf32>
    %39 = arith.negf %38 : vector<1x128xf32>
    %40 = math.exp %39 : vector<1x128xf32>
    %cst_20 = arith.constant 1.000000e+00 : f32
    %41 = vector.broadcast %cst_20 : f32 to vector<1x128xf32>
    %42 = arith.addf %41, %40 : vector<1x128xf32>
    %43 = arith.divf %41, %42 : vector<1x128xf32>
    %c0_21 = arith.constant 0 : index
    %c0_22 = arith.constant 0 : index
    %c0_23 = arith.constant 0 : index
    %44 = vector.load %arg9[%c0_21, %c0_22, %c0_23] : memref<1x1x128xf32, #tpu.memory_space<vmem>>, vector<1x1x128xf32>
    %45 = vector.shape_cast %44 : vector<1x1x128xf32> to vector<1x128xf32>
    %46 = vector.shape_cast %43 : vector<1x128xf32> to vector<1x1x128xf32>
    tpu.vector_store %arg9[%c0_21, %c0_22, %c0_23], %46 {strides = array<i32>} : memref<1x1x128xf32, #tpu.memory_space<vmem>>, vector<1x1x128xf32>,
    return
  }
  func.func @transform_0(%arg0: i32) -> (i32, i32) {
    %c0_i32 = arith.constant 0 : i32
    %c0_i32_0 = arith.constant 0 : i32
    return %arg0, %c0_i32 : i32, i32
  }
  func.func @transform_1(%arg0: i32) -> (i32, i32) {
    %c0_i32 = arith.constant 0 : i32
    %c0_i32_0 = arith.constant 0 : i32
    %c0_i32_1 = arith.constant 0 : i32
    return %c0_i32, %c0_i32_0 : i32, i32
  }
  func.func @transform_2(%arg0: i32) -> (i32, i32) {
    %c0_i32 = arith.constant 0 : i32
    %c0_i32_0 = arith.constant 0 : i32
    %c0_i32_1 = arith.constant 0 : i32
    return %c0_i32, %c0_i32_0 : i32, i32
  }
  func.func @transform_3(%arg0: i32) -> (i32, i32) {
    %c0_i32 = arith.constant 0 : i32
    %c0_i32_0 = arith.constant 0 : i32
    %c0_i32_1 = arith.constant 0 : i32
    return %c0_i32, %c0_i32_0 : i32, i32
  }
  func.func @transform_4(%arg0: i32) -> (i32, i32) {
    %c0_i32 = arith.constant 0 : i32
    %c0_i32_0 = arith.constant 0 : i32
    %c0_i32_1 = arith.constant 0 : i32
    return %c0_i32, %c0_i32_0 : i32, i32
  }
  func.func @transform_5(%arg0: i32) -> (i32, i32) {
    %c0_i32 = arith.constant 0 : i32
    %c0_i32_0 = arith.constant 0 : i32
    %c0_i32_1 = arith.constant 0 : i32
    return %c0_i32, %c0_i32_0 : i32, i32
  }
  func.func @transform_6(%arg0: i32) -> (i32, i32) {
    %c0_i32 = arith.constant 0 : i32
    %c0_i32_0 = arith.constant 0 : i32
    %c0_i32_1 = arith.constant 0 : i32
    return %c0_i32, %c0_i32_0 : i32, i32
  }
  func.func @transform_7(%arg0: i32) -> (i32, i32) {
    %c0_i32 = arith.constant 0 : i32
    %c0_i32_0 = arith.constant 0 : i32
    %c0_i32_1 = arith.constant 0 : i32
    return %c0_i32, %c0_i32_0 : i32, i32
  }
  func.func @transform_8(%arg0: i32) -> (i32, i32, i32) {
    %c0_i32 = arith.constant 0 : i32
    %c0_i32_0 = arith.constant 0 : i32
    %c0_i32_1 = arith.constant 0 : i32
    return %arg0, %c0_i32, %c0_i32_0 : i32, i32, i32
  }
}

</mosaic_0001>

<llo_original>
// kernel: tpu_custom_call.1
$region0: #{tpu_custom_call.1}
  #allocation0 [shape = 'u32[]', space=smem, size = 0x4, offset = 0x4, fixed_abs, tag = 'smem constant byte address 0x4 - core index']
  #allocation1 [shape = 'u32[72,128]{1,0:T(1,128)}', space=vmem, size = 0x9000, scoped, tag = 'internal scratch']
  #allocation2 [shape = 'f32[1,1]{1,0:T(1,128)S(1)}', space=vmem, size = 0x200, scoped, tag = 'scoped memory for tpu_custom_call.1']
  %s0 = inlined_call_operand.vmem [shape: s32[256,2], index: 0, kind: input, shape index: {}]
  %s1 = inlined_call_operand.vmem [shape: bf16[16,128], index: 1, kind: input, shape index: {}]
  %s2 = inlined_call_operand.vmem [shape: bf16[32,128], index: 2, kind: input, shape index: {}]
  %s3 = inlined_call_operand.vmem [shape: f32[1,128], index: 3, kind: input, shape index: {}]
  %s4 = inlined_call_operand.vmem [shape: bf16[128,128], index: 4, kind: input, shape index: {}]
  %s5 = inlined_call_operand.vmem [shape: f32[1,128], index: 5, kind: input, shape index: {}]
  %s6 = inlined_call_operand.vmem [shape: bf16[1,128], index: 6, kind: input, shape index: {}]
  %s7 = inlined_call_operand.<no memory space> [shape: f32[1,1], index: 7, kind: input, shape index: {}]
  %s8 = inlined_call_operand.hbm [shape: f32[2,1,128], index: 8, kind: output, shape index: {}]
  %s9 = sld [smem:[#allocation0]]
  $region65: #{tpu_custom_call.1} parent=0
    _
  %s11 = ssub.s32 1, %s9
  %s12 = scalar_select 0, %s11, %s9
  %v13 = vstv %s7
  %14 = vst [vmem:[#allocation2] sm:$0x1] %v13
  $region1: #{tpu_custom_call.1} parent=0
    #allocation3 [shape = 'u8[1024]{0}', space=vmem, size = 0x400, scoped, tag = 'output window, operand 0']
    #allocation4 [shape = 's32[2]{0}', space=sflag, size = 0x8, scoped, tag = 'scoped memory for tpu_custom_call.1']
    %15 = vsyncpa [#allocation4], 0
    %s16 = scalar_lea.sflag [#allocation4], 1
    %17 = vsyncpa %s16, 0
    loop: start=0, step=1, limit=4
    $region2: #{tpu_custom_call.1} parent=1 // loop_pre_header
      _
    $region3: #{tpu_custom_call.1} parent=1 // loop_header
      %s19 = sphi 0, %s23
      %p20 = scmp.ge.s32.totalorder %s19, 4
      %s29 = sphi 0, %s31
      %s32 = sphi 0, %s29
      %s33 = sphi 0, %s32
      %s49 = sphi 0, %s33
      %s53 = sphi 0, %s53
      %s55 = sphi 0, %s53
      %s56 = sphi 0, %s55
      %s70 = sphi 0, %s56
      %s74 = sphi 0, %s74
      %s76 = sphi 0, %s74
      %s77 = sphi 0, %s76
      %s91 = sphi 0, %s77
      %s95 = sphi 0, %s95
      %s97 = sphi 0, %s95
      %s98 = sphi 0, %s97
      %s112 = sphi 0, %s98
      %s116 = sphi 0, %s116
      %s118 = sphi 0, %s116
      %s119 = sphi 0, %s118
      %s133 = sphi 0, %s119
      %s137 = sphi 0, %s137
      %s139 = sphi 0, %s137
      %s140 = sphi 0, %s139
      %s154 = sphi 0, %s140
      %s158 = sphi 0, %s158
      %s160 = sphi 0, %s158
      %s161 = sphi 0, %s160
      %s175 = sphi 0, %s161
      %s179 = sphi 0, %s179
      %s181 = sphi 0, %s179
      %s182 = sphi 0, %s181
      %s196 = sphi 0, %s182
      %s202 = sphi 0, %s204
      %s205 = sphi 0, %s202
      %s206 = sphi 0, %s205
      %s222 = sphi 0, %s206
    $region4: #{tpu_custom_call.1} parent=1 // loop_header_branch
      %22 = sbr.rel (%p20) target = $region8
    $region5: #{tpu_custom_call.1} parent=1 // loop_body
      %s24 = ssub.s32 %s19, 1
      %s25 = ssub.s32 %s19, 2
      %s26 = sadd.s32 %s19, 1
      %s27 = ssub.s32 %s19, %s26
      %p28 = scmp.eq.s32.totalorder %s27, 0
      %s30 = sadd.s32 %s29, 1
      %s31 = scalar_select %p28, %s29, %s30
      %p34 = pneg %p28
      %p35 = scmp.eq.s32.totalorder %s19, 1
      %p36 = por %p34, %p35
      %p37 = scmp.ne.s32.totalorder %s29, %s32
      %p38 = scmp.eq.s32.totalorder %s19, 0
      %p39 = por %p37, %p38
      %p40 = scmp.ne.s32.totalorder %s29, %s32
      %p41 = scmp.eq.s32.totalorder %s24, 1
      %p42 = por %p40, %p41
      %p43 = scmp.ne.s32.totalorder %s32, %s33
      %p44 = scmp.eq.s32.totalorder %s24, 0
      %p45 = por %p43, %p44
      %p46 = scmp.ne.s32.totalorder %s32, %s33
      %p47 = scmp.eq.s32.totalorder %s25, 1
      %p48 = por %p46, %p47
      %p50 = scmp.ne.s32.totalorder %s33, %s49
      %p51 = scmp.eq.s32.totalorder %s25, 0
      %p52 = por %p50, %p51
      %s54 = sadd.s32 %s53, 1
      %p57 = scmp.eq.s32.totalorder %s19, 1
      %p58 = scmp.ne.s32.totalorder %s53, %s55
      %p59 = scmp.eq.s32.totalorder %s19, 0
      %p60 = por %p58, %p59
      %p61 = scmp.ne.s32.totalorder %s53, %s55
      %p62 = scmp.eq.s32.totalorder %s24, 1
      %p63 = por %p61, %p62
      %p64 = scmp.ne.s32.totalorder %s55, %s56
      %p65 = scmp.eq.s32.totalorder %s24, 0
      %p66 = por %p64, %p65
      %p67 = scmp.ne.s32.totalorder %s55, %s56
      %p68 = scmp.eq.s32.totalorder %s25, 1
      %p69 = por %p67, %p68
      %p71 = scmp.ne.s32.totalorder %s56, %s70
      %p72 = scmp.eq.s32.totalorder %s25, 0
      %p73 = por %p71, %p72
      %s75 = sadd.s32 %s74, 1
      %p78 = scmp.eq.s32.totalorder %s19, 1
      %p79 = scmp.ne.s32.totalorder %s74, %s76
      %p80 = scmp.eq.s32.totalorder %s19, 0
      %p81 = por %p79, %p80
      %p82 = scmp.ne.s32.totalorder %s74, %s76
      %p83 = scmp.eq.s32.totalorder %s24, 1
      %p84 = por %p82, %p83
      %p85 = scmp.ne.s32.totalorder %s76, %s77
      %p86 = scmp.eq.s32.totalorder %s24, 0
      %p87 = por %p85, %p86
      %p88 = scmp.ne.s32.totalorder %s76, %s77
      %p89 = scmp.eq.s32.totalorder %s25, 1
      %p90 = por %p88, %p89
      %p92 = scmp.ne.s32.totalorder %s77, %s91
      %p93 = scmp.eq.s32.totalorder %s25, 0
      %p94 = por %p92, %p93
      %s96 = sadd.s32 %s95, 1
      %p99 = scmp.eq.s32.totalorder %s19, 1
      %p100 = scmp.ne.s32.totalorder %s95, %s97
      %p101 = scmp.eq.s32.totalorder %s19, 0
      %p102 = por %p100, %p101
      %p103 = scmp.ne.s32.totalorder %s95, %s97
      %p104 = scmp.eq.s32.totalorder %s24, 1
      %p105 = por %p103, %p104
      %p106 = scmp.ne.s32.totalorder %s97, %s98
      %p107 = scmp.eq.s32.totalorder %s24, 0
      %p108 = por %p106, %p107
      %p109 = scmp.ne.s32.totalorder %s97, %s98
      %p110 = scmp.eq.s32.totalorder %s25, 1
      %p111 = por %p109, %p110
      %p113 = scmp.ne.s32.totalorder %s98, %s112
      %p114 = scmp.eq.s32.totalorder %s25, 0
      %p115 = por %p113, %p114
      %s117 = sadd.s32 %s116, 1
      %p120 = scmp.eq.s32.totalorder %s19, 1
      %p121 = scmp.ne.s32.totalorder %s116, %s118
      %p122 = scmp.eq.s32.totalorder %s19, 0
      %p123 = por %p121, %p122
      %p124 = scmp.ne.s32.totalorder %s116, %s118
      %p125 = scmp.eq.s32.totalorder %s24, 1
      %p126 = por %p124, %p125
      %p127 = scmp.ne.s32.totalorder %s118, %s119
      %p128 = scmp.eq.s32.totalorder %s24, 0
      %p129 = por %p127, %p128
      %p130 = scmp.ne.s32.totalorder %s118, %s119
      %p131 = scmp.eq.s32.totalorder %s25, 1
      %p132 = por %p130, %p131
      %p134 = scmp.ne.s32.totalorder %s119, %s133
      %p135 = scmp.eq.s32.totalorder %s25, 0
      %p136 = por %p134, %p135
      %s138 = sadd.s32 %s137, 1
      %p141 = scmp.eq.s32.totalorder %s19, 1
      %p142 = scmp.ne.s32.totalorder %s137, %s139
      %p143 = scmp.eq.s32.totalorder %s19, 0
      %p144 = por %p142, %p143
      %p145 = scmp.ne.s32.totalorder %s137, %s139
      %p146 = scmp.eq.s32.totalorder %s24, 1
      %p147 = por %p145, %p146
      %p148 = scmp.ne.s32.totalorder %s139, %s140
      %p149 = scmp.eq.s32.totalorder %s24, 0
      %p150 = por %p148, %p149
      %p151 = scmp.ne.s32.totalorder %s139, %s140
      %p152 = scmp.eq.s32.totalorder %s25, 1
      %p153 = por %p151, %p152
      %p155 = scmp.ne.s32.totalorder %s140, %s154
      %p156 = scmp.eq.s32.totalorder %s25, 0
      %p157 = por %p155, %p156
      %s159 = sadd.s32 %s158, 1
      %p162 = scmp.eq.s32.totalorder %s19, 1
      %p163 = scmp.ne.s32.totalorder %s158, %s160
      %p164 = scmp.eq.s32.totalorder %s19, 0
      %p165 = por %p163, %p164
      %p166 = scmp.ne.s32.totalorder %s158, %s160
      %p167 = scmp.eq.s32.totalorder %s24, 1
      %p168 = por %p166, %p167
      %p169 = scmp.ne.s32.totalorder %s160, %s161
      %p170 = scmp.eq.s32.totalorder %s24, 0
      %p171 = por %p169, %p170
      %p172 = scmp.ne.s32.totalorder %s160, %s161
      %p173 = scmp.eq.s32.totalorder %s25, 1
      %p174 = por %p172, %p173
      %p176 = scmp.ne.s32.totalorder %s161, %s175
      %p177 = scmp.eq.s32.totalorder %s25, 0
      %p178 = por %p176, %p177
      %s180 = sadd.s32 %s179, 1
      %p183 = scmp.eq.s32.totalorder %s19, 1
      %p184 = scmp.ne.s32.totalorder %s179, %s181
      %p185 = scmp.eq.s32.totalorder %s19, 0
      %p186 = por %p184, %p185
      %p187 = scmp.ne.s32.totalorder %s179, %s181
      %p188 = scmp.eq.s32.totalorder %s24, 1
      %p189 = por %p187, %p188
      %p190 = scmp.ne.s32.totalorder %s181, %s182
      %p191 = scmp.eq.s32.totalorder %s24, 0
      %p192 = por %p190, %p191
      %p193 = scmp.ne.s32.totalorder %s181, %s182
      %p194 = scmp.eq.s32.totalorder %s25, 1
      %p195 = por %p193, %p194
      %p197 = scmp.ne.s32.totalorder %s182, %s196
      %p198 = scmp.eq.s32.totalorder %s25, 0
      %p199 = por %p197, %p198
      %s200 = ssub.s32 %s19, %s26
      %p201 = scmp.eq.s32.totalorder %s200, 0
      %s203 = sadd.s32 %s202, 1
      %s204 = scalar_select %p201, %s202, %s203
      %p207 = pneg %p201
      %p208 = scmp.eq.s32.totalorder %s19, 1
      %p209 = por %p207, %p208
      %p210 = scmp.ne.s32.totalorder %s202, %s205
      %p211 = scmp.eq.s32.totalorder %s19, 0
      %p212 = por %p210, %p211
      %p213 = scmp.ne.s32.totalorder %s202, %s205
      %p214 = scmp.eq.s32.totalorder %s24, 1
      %p215 = por %p213, %p214
      %p216 = scmp.ne.s32.totalorder %s205, %s206
      %p217 = scmp.eq.s32.totalorder %s24, 0
      %p218 = por %p216, %p217
      %p219 = scmp.ne.s32.totalorder %s205, %s206
      %p220 = scmp.eq.s32.totalorder %s25, 1
      %p221 = por %p219, %p220
      %p223 = scmp.ne.s32.totalorder %s206, %s222
      %p224 = scmp.eq.s32.totalorder %s25, 0
      %p225 = por %p223, %p224
      %p226 = scmp.le.s32.totalorder 1, %s19
      %p227 = scmp.lt.s32.totalorder %s19, 3
      %p228 = pnand %p226, %p227
      %p229 = pneg %p228
      // Predicated region
      $region9: #{tpu_custom_call.1} parent=5 // pred_check
        _
      $region10: #{tpu_custom_call.1} parent=5 // pred_check_branch
        %231 = sbr.rel (%p228) target = $region12
      $region11: #{tpu_custom_call.1} parent=5 // pred_region
        %s232 = ssub.s32 %s19, 1
        // Predicated region
        $region13: #{tpu_custom_call.1} parent=11 // pred_check
          %p233 = pneg %p66
        $region14: #{tpu_custom_call.1} parent=11 // pred_check_branch
          %235 = sbr.rel (%p233) target = $region16
        $region15: #{tpu_custom_call.1} parent=11 // pred_region
          _
        $region16: #{tpu_custom_call.1} parent=11 // pred_fallthru
          _
        // Predicated region
        $region17: #{tpu_custom_call.1} parent=11 // pred_check
          %p236 = pneg %p87
        $region18: #{tpu_custom_call.1} parent=11 // pred_check_branch
          %238 = sbr.rel (%p236) target = $region20
        $region19: #{tpu_custom_call.1} parent=11 // pred_region
          _
        $region20: #{tpu_custom_call.1} parent=11 // pred_fallthru
          _
        // Predicated region
        $region21: #{tpu_custom_call.1} parent=11 // pred_check
          %p239 = pneg %p108
        $region22: #{tpu_custom_call.1} parent=11 // pred_check_branch
          %241 = sbr.rel (%p239) target = $region24
        $region23: #{tpu_custom_call.1} parent=11 // pred_region
          _
        $region24: #{tpu_custom_call.1} parent=11 // pred_fallthru
          _
        // Predicated region
        $region25: #{tpu_custom_call.1} parent=11 // pred_check
          %p242 = pneg %p129
        $region26: #{tpu_custom_call.1} parent=11 // pred_check_branch
          %244 = sbr.rel (%p242) target = $region28
        $region27: #{tpu_custom_call.1} parent=11 // pred_region
          _
        $region28: #{tpu_custom_call.1} parent=11 // pred_fallthru
          _
        // Predicated region
        $region29: #{tpu_custom_call.1} parent=11 // pred_check
          %p245 = pneg %p150
        $region30: #{tpu_custom_call.1} parent=11 // pred_check_branch
          %247 = sbr.rel (%p245) target = $region32
        $region31: #{tpu_custom_call.1} parent=11 // pred_region
          _
        $region32: #{tpu_custom_call.1} parent=11 // pred_fallthru
          _
        // Predicated region
        $region33: #{tpu_custom_call.1} parent=11 // pred_check
          %p248 = pneg %p171
        $region34: #{tpu_custom_call.1} parent=11 // pred_check_branch
          %250 = sbr.rel (%p248) target = $region36
        $region35: #{tpu_custom_call.1} parent=11 // pred_region
          _
        $region36: #{tpu_custom_call.1} parent=11 // pred_fallthru
          _
        // Predicated region
        $region37: #{tpu_custom_call.1} parent=11 // pred_check
          %p251 = pneg %p192
        $region38: #{tpu_custom_call.1} parent=11 // pred_check_branch
          %253 = sbr.rel (%p251) target = $region40
        $region39: #{tpu_custom_call.1} parent=11 // pred_region
          _
        $region40: #{tpu_custom_call.1} parent=11 // pred_fallthru
          _
      $region12: #{tpu_custom_call.1} parent=5 // pred_fallthru
        _
      %p254 = scmp.lt.s32.totalorder %s19, 2
      // Predicated region
      $region41: #{tpu_custom_call.1} parent=5 // pred_check
        %p255 = pneg %p254
      $region42: #{tpu_custom_call.1} parent=5 // pred_check_branch
        %257 = sbr.rel (%p255) target = $region44
      $region43: #{tpu_custom_call.1} parent=5 // pred_region
        // Predicated region
        $region45: #{tpu_custom_call.1} parent=43 // pred_check
          %p258 = pneg %p39
        $region46: #{tpu_custom_call.1} parent=43 // pred_check_branch
          %260 = sbr.rel (%p258) target = $region48
        $region47: #{tpu_custom_call.1} parent=43 // pred_region
          %s261 = smul.u32 16, %s19
          %p262 = scmp.lt.s32.totalorder %s261, 31
          %s263 = scalar_select %p262, %s261, 31
          %s264 = smul.addr %s263, 8
          %s265 = scalar_lea.vmem %s0, %s264
          %s266 = smul.u32 16, %s19
        $region48: #{tpu_custom_call.1} parent=43 // pred_fallthru
          _
      $region44: #{tpu_custom_call.1} parent=5 // pred_fallthru
        _
      %p267 = scmp.le.s32.totalorder 1, %s19
      %p268 = scmp.lt.s32.totalorder %s19, 3
      %p269 = pnand %p267, %p268
      %p270 = pneg %p269
      // Predicated region
      $region49: #{tpu_custom_call.1} parent=5 // pred_check
        _
      $region50: #{tpu_custom_call.1} parent=5 // pred_check_branch
        %272 = sbr.rel (%p269) target = $region52
      $region51: #{tpu_custom_call.1} parent=5 // pred_region
        %s273 = ssub.s32 %s19, 1
        %s274 = smul.u32 16, %s24
        %p275 = scmp.lt.s32.totalorder %s274, 31
        %s276 = scalar_select %p275, %s274, 31
        %s277 = smul.addr %s276, 8
        %s278 = scalar_lea.vmem %s0, %s277
        %p279 = pneg %p45
        %p280 = pneg %p42
        %p281 = pneg %p66
        %p282 = pneg %p63
        %p283 = pneg %p87
        %p284 = pneg %p84
        %p285 = pneg %p108
        %p286 = pneg %p105
        %p287 = pneg %p129
        %p288 = pneg %p126
        %p289 = pneg %p150
        %p290 = pneg %p147
        %p291 = pneg %p171
        %p292 = pneg %p168
        %p293 = pneg %p192
        %p294 = pneg %p189
        %p295 = pneg %p218
        %p296 = pneg %p215
        %s297 = sand.u32 %s205, 1
        %s298 = scalar_lea.sflag [#allocation4], %s297
        %s299 = sand.u32 %s205, 1
        %s300 = scalar_lea.vmem [#allocation3], %s299
        %s301 = smul.u32 16, %s24
        %p302 = scmp.lt.s32.totalorder %s301, 31
        %s303 = scalar_select %p302, %s301, 31
        %s304 = smul.addr %s303, 8
        %s305 = scalar_lea.vmem %s0, %s304
        %s306 = smul.u32 16, %s24
        %v308 = vld [vmem:[%s305] sm:$0xff]
        %v309 = vld [vmem:[%s305 + $0x8] sm:$0xff]
        %v310 = vld [vmem:[%s305 + $0x10] sm:$0xff]
        %v311 = vld [vmem:[%s305 + $0x18] sm:$0xff]
        %v312 = vld [vmem:[%s305 + $0x20] sm:$0xff]
        %v313 = vld [vmem:[%s305 + $0x28] sm:$0xff]
        %v314 = vld [vmem:[%s305 + $0x30] sm:$0xff]
        %v315 = vld [vmem:[%s305 + $0x38] sm:$0xff]
        %v316 = vld [vmem:[%s305 + $0x40] sm:$0xff]
        %v317 = vld [vmem:[%s305 + $0x48] sm:$0xff]
        %v318 = vld [vmem:[%s305 + $0x50] sm:$0xff]
        %v319 = vld [vmem:[%s305 + $0x58] sm:$0xff]
        %v320 = vld [vmem:[%s305 + $0x60] sm:$0xff]
        %v321 = vld [vmem:[%s305 + $0x68] sm:$0xff]
        %v322 = vld [vmem:[%s305 + $0x70] sm:$0xff]
        %v323 = vld [vmem:[%s305 + $0x78] sm:$0xff]
        %v324 = vlaneseq
        %v325 = vand.u32 %v324, 127
        %326 = vset.pattern.permute.xlu0 0
        %327 = vperm.xlu0 %326, %v308
        %v328 = vpop.permute.xlu0 %327
        %329 = vset.pattern.permute.xlu0 0
        %330 = vperm.xlu0 %329, %v309
        %v331 = vpop.permute.xlu0 %330
        %332 = vset.pattern.permute.xlu0 0
        %333 = vperm.xlu0 %332, %v310
        %v334 = vpop.permute.xlu0 %333
        %335 = vset.pattern.permute.xlu0 0
        %336 = vperm.xlu0 %335, %v311
        %v337 = vpop.permute.xlu0 %336
        %338 = vset.pattern.permute.xlu0 0
        %339 = vperm.xlu0 %338, %v312
        %v340 = vpop.permute.xlu0 %339
        %341 = vset.pattern.permute.xlu0 0
        %342 = vperm.xlu0 %341, %v313
        %v343 = vpop.permute.xlu0 %342
        %344 = vset.pattern.permute.xlu0 0
        %345 = vperm.xlu0 %344, %v314
        %v346 = vpop.permute.xlu0 %345
        %347 = vset.pattern.permute.xlu0 0
        %348 = vperm.xlu0 %347, %v315
        %v349 = vpop.permute.xlu0 %348
        %350 = vset.pattern.permute.xlu0 0
        %351 = vperm.xlu0 %350, %v316
        %v352 = vpop.permute.xlu0 %351
        %353 = vset.pattern.permute.xlu0 0
        %354 = vperm.xlu0 %353, %v317
        %v355 = vpop.permute.xlu0 %354
        %356 = vset.pattern.permute.xlu0 0
        %357 = vperm.xlu0 %356, %v318
        %v358 = vpop.permute.xlu0 %357
        %359 = vset.pattern.permute.xlu0 0
        %360 = vperm.xlu0 %359, %v319
        %v361 = vpop.permute.xlu0 %360
        %362 = vset.pattern.permute.xlu0 0
        %363 = vperm.xlu0 %362, %v320
        %v364 = vpop.permute.xlu0 %363
        %365 = vset.pattern.permute.xlu0 0
        %366 = vperm.xlu0 %365, %v321
        %v367 = vpop.permute.xlu0 %366
        %368 = vset.pattern.permute.xlu0 0
        %369 = vperm.xlu0 %368, %v322
        %v370 = vpop.permute.xlu0 %369
        %371 = vset.pattern.permute.xlu0 0
        %372 = vperm.xlu0 %371, %v323
        %v373 = vpop.permute.xlu0 %372
        %vm374 = vcmp.eq.s32.totalorder %v325, %v328
        %vm375 = vcmp.eq.s32.totalorder %v325, %v331
        %vm376 = vcmp.eq.s32.totalorder %v325, %v334
        %vm377 = vcmp.eq.s32.totalorder %v325, %v337
        %vm378 = vcmp.eq.s32.totalorder %v325, %v340
        %vm379 = vcmp.eq.s32.totalorder %v325, %v343
        %vm380 = vcmp.eq.s32.totalorder %v325, %v346
        %vm381 = vcmp.eq.s32.totalorder %v325, %v349
        %vm382 = vcmp.eq.s32.totalorder %v325, %v352
        %vm383 = vcmp.eq.s32.totalorder %v325, %v355
        %vm384 = vcmp.eq.s32.totalorder %v325, %v358
        %vm385 = vcmp.eq.s32.totalorder %v325, %v361
        %vm386 = vcmp.eq.s32.totalorder %v325, %v364
        %vm387 = vcmp.eq.s32.totalorder %v325, %v367
        %vm388 = vcmp.eq.s32.totalorder %v325, %v370
        %vm389 = vcmp.eq.s32.totalorder %v325, %v373
        %v390 = vsel %vm374, 1, 0
        %v391 = vsel %vm375, 1, 0
        %v392 = vsel %vm376, 1, 0
        %v393 = vsel %vm377, 1, 0
        %v394 = vsel %vm378, 1, 0
        %v395 = vsel %vm379, 1, 0
        %v396 = vsel %vm380, 1, 0
        %v397 = vsel %vm381, 1, 0
        %v398 = vsel %vm382, 1, 0
        %v399 = vsel %vm383, 1, 0
        %v400 = vsel %vm384, 1, 0
        %v401 = vsel %vm385, 1, 0
        %v402 = vsel %vm386, 1, 0
        %v403 = vsel %vm387, 1, 0
        %v404 = vsel %vm388, 1, 0
        %v405 = vsel %vm389, 1, 0
        %v406 = vcvt.s32.f32 %v390
        %v407 = vcvt.s32.f32 %v391
        %v408 = vcvt.s32.f32 %v392
        %v409 = vcvt.s32.f32 %v393
        %v410 = vcvt.s32.f32 %v394
        %v411 = vcvt.s32.f32 %v395
        %v412 = vcvt.s32.f32 %v396
        %v413 = vcvt.s32.f32 %v397
        %v414 = vcvt.s32.f32 %v398
        %v415 = vcvt.s32.f32 %v399
        %v416 = vcvt.s32.f32 %v400
        %v417 = vcvt.s32.f32 %v401
        %v418 = vcvt.s32.f32 %v402
        %v419 = vcvt.s32.f32 %v403
        %v420 = vcvt.s32.f32 %v404
        %v421 = vcvt.s32.f32 %v405
        %v422 = vpack.c.bf16 %v407, %v406
        %v423 = vpack.c.bf16 %v409, %v408
        %v424 = vpack.c.bf16 %v411, %v410
        %v425 = vpack.c.bf16 %v413, %v412
        %v426 = vpack.c.bf16 %v415, %v414
        %v427 = vpack.c.bf16 %v417, %v416
        %v428 = vpack.c.bf16 %v419, %v418
        %v429 = vpack.c.bf16 %v421, %v420
        %430 = vset.pattern.permute.xlu0 1
        %431 = vperm.xlu0 %430, %v308
        %v432 = vpop.permute.xlu0 %431
        %433 = vset.pattern.permute.xlu0 1
        %434 = vperm.xlu0 %433, %v309
        %v435 = vpop.permute.xlu0 %434
        %436 = vset.pattern.permute.xlu0 1
        %437 = vperm.xlu0 %436, %v310
        %v438 = vpop.permute.xlu0 %437
        %439 = vset.pattern.permute.xlu0 1
        %440 = vperm.xlu0 %439, %v311
        %v441 = vpop.permute.xlu0 %440
        %442 = vset.pattern.permute.xlu0 1
        %443 = vperm.xlu0 %442, %v312
        %v444 = vpop.permute.xlu0 %443
        %445 = vset.pattern.permute.xlu0 1
        %446 = vperm.xlu0 %445, %v313
        %v447 = vpop.permute.xlu0 %446
        %448 = vset.pattern.permute.xlu0 1
        %449 = vperm.xlu0 %448, %v314
        %v450 = vpop.permute.xlu0 %449
        %451 = vset.pattern.permute.xlu0 1
        %452 = vperm.xlu0 %451, %v315
        %v453 = vpop.permute.xlu0 %452
        %454 = vset.pattern.permute.xlu0 1
        %455 = vperm.xlu0 %454, %v316
        %v456 = vpop.permute.xlu0 %455
        %457 = vset.pattern.permute.xlu0 1
        %458 = vperm.xlu0 %457, %v317
        %v459 = vpop.permute.xlu0 %458
        %460 = vset.pattern.permute.xlu0 1
        %461 = vperm.xlu0 %460, %v318
        %v462 = vpop.permute.xlu0 %461
        %463 = vset.pattern.permute.xlu0 1
        %464 = vperm.xlu0 %463, %v319
        %v465 = vpop.permute.xlu0 %464
        %466 = vset.pattern.permute.xlu0 1
        %467 = vperm.xlu0 %466, %v320
        %v468 = vpop.permute.xlu0 %467
        %469 = vset.pattern.permute.xlu0 1
        %470 = vperm.xlu0 %469, %v321
        %v471 = vpop.permute.xlu0 %470
        %472 = vset.pattern.permute.xlu0 1
        %473 = vperm.xlu0 %472, %v322
        %v474 = vpop.permute.xlu0 %473
        %475 = vset.pattern.permute.xlu0 1
        %476 = vperm.xlu0 %475, %v323
        %v477 = vpop.permute.xlu0 %476
        %vm478 = vcmp.eq.s32.totalorder %v325, %v432
        %vm479 = vcmp.eq.s32.totalorder %v325, %v435
        %vm480 = vcmp.eq.s32.totalorder %v325, %v438
        %vm481 = vcmp.eq.s32.totalorder %v325, %v441
        %vm482 = vcmp.eq.s32.totalorder %v325, %v444
        %vm483 = vcmp.eq.s32.totalorder %v325, %v447
        %vm484 = vcmp.eq.s32.totalorder %v325, %v450
        %vm485 = vcmp.eq.s32.totalorder %v325, %v453
        %vm486 = vcmp.eq.s32.totalorder %v325, %v456
        %vm487 = vcmp.eq.s32.totalorder %v325, %v459
        %vm488 = vcmp.eq.s32.totalorder %v325, %v462
        %vm489 = vcmp.eq.s32.totalorder %v325, %v465
        %vm490 = vcmp.eq.s32.totalorder %v325, %v468
        %vm491 = vcmp.eq.s32.totalorder %v325, %v471
        %vm492 = vcmp.eq.s32.totalorder %v325, %v474
        %vm493 = vcmp.eq.s32.totalorder %v325, %v477
        %v494 = vsel %vm478, 1, 0
        %v495 = vsel %vm479, 1, 0
        %v496 = vsel %vm480, 1, 0
        %v497 = vsel %vm481, 1, 0
        %v498 = vsel %vm482, 1, 0
        %v499 = vsel %vm483, 1, 0
        %v500 = vsel %vm484, 1, 0
        %v501 = vsel %vm485, 1, 0
        %v502 = vsel %vm486, 1, 0
        %v503 = vsel %vm487, 1, 0
        %v504 = vsel %vm488, 1, 0
        %v505 = vsel %vm489, 1, 0
        %v506 = vsel %vm490, 1, 0
        %v507 = vsel %vm491, 1, 0
        %v508 = vsel %vm492, 1, 0
        %v509 = vsel %vm493, 1, 0
        %v510 = vcvt.s32.f32 %v494
        %v511 = vcvt.s32.f32 %v495
        %v512 = vcvt.s32.f32 %v496
        %v513 = vcvt.s32.f32 %v497
        %v514 = vcvt.s32.f32 %v498
        %v515 = vcvt.s32.f32 %v499
        %v516 = vcvt.s32.f32 %v500
        %v517 = vcvt.s32.f32 %v501
        %v518 = vcvt.s32.f32 %v502
        %v519 = vcvt.s32.f32 %v503
        %v520 = vcvt.s32.f32 %v504
        %v521 = vcvt.s32.f32 %v505
        %v522 = vcvt.s32.f32 %v506
        %v523 = vcvt.s32.f32 %v507
        %v524 = vcvt.s32.f32 %v508
        %v525 = vcvt.s32.f32 %v509
        %v526 = vpack.c.bf16 %v511, %v510
        %v527 = vpack.c.bf16 %v513, %v512
        %v528 = vpack.c.bf16 %v515, %v514
        %v529 = vpack.c.bf16 %v517, %v516
        %v530 = vpack.c.bf16 %v519, %v518
        %v531 = vpack.c.bf16 %v521, %v520
        %v532 = vpack.c.bf16 %v523, %v522
        %v533 = vpack.c.bf16 %v525, %v524
        %v534 = vld [vmem:[%s1] sm:$0xf]
        %v535 = vld [vmem:[%s1 + $0x4] sm:$0xf]
        %v536 = vld [vmem:[%s2] sm:$0xf]
        %v537 = vld [vmem:[%s2 + $0x4] sm:$0xf]
        %v538 = vld [vmem:[%s2 + $0x8] sm:$0xf]
        %v539 = vld [vmem:[%s2 + $0xc] sm:$0xf]
        %v544 = vunpack.c.l.b16 %v536
        %v545 = vunpack.c.l.b16 %v537
        %v546 = vunpack.c.l.b16 %v538
        %v547 = vunpack.c.l.b16 %v539
        %v548 = vpack.c.b16 %v545, %v544
        %v549 = vpack.c.b16 %v547, %v546
        %vm552 = vcmask 261120
        %v554 = vsel %vm552, %v526, 0
        %v557 = vsel %vm552, %v527, 0
        %v560 = vsel %vm552, %v528, 0
        %v563 = vsel %vm552, %v529, 0
        %v566 = vsel %vm552, %v530, 0
        %v569 = vsel %vm552, %v531, 0
        %v572 = vsel %vm552, %v532, 0
        %v575 = vsel %vm552, %v533, 0
        %577 = vmatpush.bf16.msra.mxu0 0
        %578 = vmatpush.bf16.msra.mxu0 0
        %579 = vmatpush.bf16.msra.mxu0 0
        %580 = vmatpush.bf16.msra.mxu0 0
        %581 = vmatpush.bf16.msra.mxu0 0
        %582 = vmatpush.bf16.msra.mxu0 0
        %583 = vmatpush.bf16.msra.mxu0 %v549
        %584 = vmatpush.bf16.msra.mxu0 %v548
        %585 = vmatmul.bf16.gmra.mxu0 %v554
        %v586 = vpop.f32.mrf.mxu0
        %v587 = vadd.f32 0.0, %v586
        %v588 = vpop.f32.mrf.mxu0
        %v589 = vadd.f32 0.0, %v588
        %590 = vmatmul.bf16.gmra.mxu0 %v557
        %v591 = vpop.f32.mrf.mxu0
        %v592 = vadd.f32 0.0, %v591
        %v593 = vpop.f32.mrf.mxu0
        %v594 = vadd.f32 0.0, %v593
        %595 = vmatmul.bf16.gmra.mxu0 %v560
        %v596 = vpop.f32.mrf.mxu0
        %v597 = vadd.f32 0.0, %v596
        %v598 = vpop.f32.mrf.mxu0
        %v599 = vadd.f32 0.0, %v598
        %600 = vmatmul.bf16.gmra.mxu0 %v563
        %v601 = vpop.f32.mrf.mxu0
        %v602 = vadd.f32 0.0, %v601
        %v603 = vpop.f32.mrf.mxu0
        %v604 = vadd.f32 0.0, %v603
        %605 = vmatmul.bf16.gmra.mxu0 %v566
        %v606 = vpop.f32.mrf.mxu0
        %v607 = vadd.f32 0.0, %v606
        %v608 = vpop.f32.mrf.mxu0
        %v609 = vadd.f32 0.0, %v608
        %610 = vmatmul.bf16.gmra.mxu0 %v569
        %v611 = vpop.f32.mrf.mxu0
        %v612 = vadd.f32 0.0, %v611
        %v613 = vpop.f32.mrf.mxu0
        %v614 = vadd.f32 0.0, %v613
        %615 = vmatmul.bf16.gmra.mxu0 %v572
        %v616 = vpop.f32.mrf.mxu0
        %v617 = vadd.f32 0.0, %v616
        %v618 = vpop.f32.mrf.mxu0
        %v619 = vadd.f32 0.0, %v618
        %620 = vmatmul.bf16.gmra.mxu0 %v575
        %v621 = vpop.f32.mrf.mxu0
        %v622 = vadd.f32 0.0, %v621
        %v623 = vpop.f32.mrf.mxu0
        %v624 = vadd.f32 0.0, %v623
        %625 = vdwg.mxu0
        %v628 = vunpack.c.l.b16 %v534
        %v629 = vunpack.c.l.b16 %v535
        %v630 = vpack.c.b16 %v629, %v628
        %vm632 = vcmask 130048
        %v634 = vsel %vm632, %v422, 0
        %v637 = vsel %vm632, %v423, 0
        %v640 = vsel %vm632, %v424, 0
        %v643 = vsel %vm632, %v425, 0
        %v646 = vsel %vm632, %v426, 0
        %v649 = vsel %vm632, %v427, 0
        %v652 = vsel %vm632, %v428, 0
        %v655 = vsel %vm632, %v429, 0
        %657 = vmatpush.bf16.msra.mxu0 0
        %658 = vmatpush.bf16.msra.mxu0 0
        %659 = vmatpush.bf16.msra.mxu0 0
        %660 = vmatpush.bf16.msra.mxu0 0
        %661 = vmatpush.bf16.msra.mxu0 0
        %662 = vmatpush.bf16.msra.mxu0 0
        %663 = vmatpush.bf16.msra.mxu0 0
        %664 = vmatpush.bf16.msra.mxu0 %v630
        %665 = vmatmul.bf16.gmra.mxu0 %v634
        %v666 = vpop.f32.mrf.mxu0
        %v667 = vadd.f32 %v587, %v666
        %v668 = vpop.f32.mrf.mxu0
        %v669 = vadd.f32 %v589, %v668
        %670 = vmatmul.bf16.gmra.mxu0 %v637
        %v671 = vpop.f32.mrf.mxu0
        %v672 = vadd.f32 %v592, %v671
        %v673 = vpop.f32.mrf.mxu0
        %v674 = vadd.f32 %v594, %v673
        %675 = vmatmul.bf16.gmra.mxu0 %v640
        %v676 = vpop.f32.mrf.mxu0
        %v677 = vadd.f32 %v597, %v676
        %v678 = vpop.f32.mrf.mxu0
        %v679 = vadd.f32 %v599, %v678
        %680 = vmatmul.bf16.gmra.mxu0 %v643
        %v681 = vpop.f32.mrf.mxu0
        %v682 = vadd.f32 %v602, %v681
        %v683 = vpop.f32.mrf.mxu0
        %v684 = vadd.f32 %v604, %v683
        %685 = vmatmul.bf16.gmra.mxu0 %v646
        %v686 = vpop.f32.mrf.mxu0
        %v687 = vadd.f32 %v607, %v686
        %v688 = vpop.f32.mrf.mxu0
        %v689 = vadd.f32 %v609, %v688
        %690 = vmatmul.bf16.gmra.mxu0 %v649
        %v691 = vpop.f32.mrf.mxu0
        %v692 = vadd.f32 %v612, %v691
        %v693 = vpop.f32.mrf.mxu0
        %v694 = vadd.f32 %v614, %v693
        %695 = vmatmul.bf16.gmra.mxu0 %v652
        %v696 = vpop.f32.mrf.mxu0
        %v697 = vadd.f32 %v617, %v696
        %v698 = vpop.f32.mrf.mxu0
        %v699 = vadd.f32 %v619, %v698
        %700 = vmatmul.bf16.gmra.mxu0 %v655
        %v701 = vpop.f32.mrf.mxu0
        %v702 = vadd.f32 %v622, %v701
        %v703 = vpop.f32.mrf.mxu0
        %v704 = vadd.f32 %v624, %v703
        %705 = vdwg.mxu0
        %v706 = vld [vmem:[%s3] sm:$0x1]
        %v708 = vperm.slane %v706, 0
        %v710 = vadd.f32 %v667, %v708
        %v711 = vadd.f32 %v669, %v708
        %v712 = vadd.f32 %v672, %v708
        %v713 = vadd.f32 %v674, %v708
        %v714 = vadd.f32 %v677, %v708
        %v715 = vadd.f32 %v679, %v708
        %v716 = vadd.f32 %v682, %v708
        %v717 = vadd.f32 %v684, %v708
        %v718 = vadd.f32 %v687, %v708
        %v719 = vadd.f32 %v689, %v708
        %v720 = vadd.f32 %v692, %v708
        %v721 = vadd.f32 %v694, %v708
        %v722 = vadd.f32 %v697, %v708
        %v723 = vadd.f32 %v699, %v708
        %v724 = vadd.f32 %v702, %v708
        %v725 = vadd.f32 %v704, %v708
        %v726 = vmax.f32 %v710, 0.0
        %v727 = vmax.f32 %v711, 0.0
        %v728 = vmax.f32 %v712, 0.0
        %v729 = vmax.f32 %v713, 0.0
        %v730 = vmax.f32 %v714, 0.0
        %v731 = vmax.f32 %v715, 0.0
        %v732 = vmax.f32 %v716, 0.0
        %v733 = vmax.f32 %v717, 0.0
        %v734 = vmax.f32 %v718, 0.0
        %v735 = vmax.f32 %v719, 0.0
        %v736 = vmax.f32 %v720, 0.0
        %v737 = vmax.f32 %v721, 0.0
        %v738 = vmax.f32 %v722, 0.0
        %v739 = vmax.f32 %v723, 0.0
        %v740 = vmax.f32 %v724, 0.0
        %v741 = vmax.f32 %v725, 0.0
        %v742 = vpack.c.bf16 %v727, %v726
        %v743 = vpack.c.bf16 %v729, %v728
        %v744 = vpack.c.bf16 %v731, %v730
        %v745 = vpack.c.bf16 %v733, %v732
        %v746 = vpack.c.bf16 %v735, %v734
        %v747 = vpack.c.bf16 %v737, %v736
        %v748 = vpack.c.bf16 %v739, %v738
        %v749 = vpack.c.bf16 %v741, %v740
        %v750 = vld [vmem:[%s4] sm:$0xf]
        %v751 = vld [vmem:[%s4 + $0x4] sm:$0xf]
        %v752 = vld [vmem:[%s4 + $0x8] sm:$0xf]
        %v753 = vld [vmem:[%s4 + $0xc] sm:$0xf]
        %v754 = vld [vmem:[%s4 + $0x10] sm:$0xf]
        %v755 = vld [vmem:[%s4 + $0x14] sm:$0xf]
        %v756 = vld [vmem:[%s4 + $0x18] sm:$0xf]
        %v757 = vld [vmem:[%s4 + $0x1c] sm:$0xf]
        %v758 = vld [vmem:[%s4 + $0x20] sm:$0xf]
        %v759 = vld [vmem:[%s4 + $0x24] sm:$0xf]
        %v760 = vld [vmem:[%s4 + $0x28] sm:$0xf]
        %v761 = vld [vmem:[%s4 + $0x2c] sm:$0xf]
        %v762 = vld [vmem:[%s4 + $0x30] sm:$0xf]
        %v763 = vld [vmem:[%s4 + $0x34] sm:$0xf]
        %v764 = vld [vmem:[%s4 + $0x38] sm:$0xf]
        %v765 = vld [vmem:[%s4 + $0x3c] sm:$0xf]
        %v766 = vld [vmem:[%s5] sm:$0x1]
        %v768 = vperm.slane %v766, 0
        %v786 = vunpack.c.l.b16 %v750
        %v787 = vunpack.c.l.b16 %v751
        %v788 = vunpack.c.l.b16 %v752
        %v789 = vunpack.c.l.b16 %v753
        %v790 = vunpack.c.l.b16 %v754
        %v791 = vunpack.c.l.b16 %v755
        %v792 = vunpack.c.l.b16 %v756
        %v793 = vunpack.c.l.b16 %v757
        %v794 = vunpack.c.l.b16 %v758
        %v795 = vunpack.c.l.b16 %v759
        %v796 = vunpack.c.l.b16 %v760
        %v797 = vunpack.c.l.b16 %v761
        %v798 = vunpack.c.l.b16 %v762
        %v799 = vunpack.c.l.b16 %v763
        %v800 = vunpack.c.l.b16 %v764
        %v801 = vunpack.c.l.b16 %v765
        %v802 = vpack.c.b16 %v787, %v786
        %v803 = vpack.c.b16 %v789, %v788
        %v804 = vpack.c.b16 %v791, %v790
        %v805 = vpack.c.b16 %v793, %v792
        %v806 = vpack.c.b16 %v795, %v794
        %v807 = vpack.c.b16 %v797, %v796
        %v808 = vpack.c.b16 %v799, %v798
        %v809 = vpack.c.b16 %v801, %v800
        %818 = vmatpush.bf16.msra.mxu0 %v809
        %819 = vmatpush.bf16.msra.mxu0 %v808
        %820 = vmatpush.bf16.msra.mxu0 %v807
        %821 = vmatpush.bf16.msra.mxu0 %v806
        %822 = vmatpush.bf16.msra.mxu0 %v805
        %823 = vmatpush.bf16.msra.mxu0 %v804
        %824 = vmatpush.bf16.msra.mxu0 %v803
        %825 = vmatpush.bf16.msra.mxu0 %v802
        %826 = vmatmul.bf16.gmra.mxu0 %v742
        %v827 = vpop.f32.mrf.mxu0
        %v828 = vadd.f32 %v768, %v827
        %v829 = vpop.f32.mrf.mxu0
        %v830 = vadd.f32 %v768, %v829
        %831 = vmatmul.bf16.gmra.mxu0 %v743
        %v832 = vpop.f32.mrf.mxu0
        %v833 = vadd.f32 %v768, %v832
        %v834 = vpop.f32.mrf.mxu0
        %v835 = vadd.f32 %v768, %v834
        %836 = vmatmul.bf16.gmra.mxu0 %v744
        %v837 = vpop.f32.mrf.mxu0
        %v838 = vadd.f32 %v768, %v837
        %v839 = vpop.f32.mrf.mxu0
        %v840 = vadd.f32 %v768, %v839
        %841 = vmatmul.bf16.gmra.mxu0 %v745
        %v842 = vpop.f32.mrf.mxu0
        %v843 = vadd.f32 %v768, %v842
        %v844 = vpop.f32.mrf.mxu0
        %v845 = vadd.f32 %v768, %v844
        %846 = vmatmul.bf16.gmra.mxu0 %v746
        %v847 = vpop.f32.mrf.mxu0
        %v848 = vadd.f32 %v768, %v847
        %v849 = vpop.f32.mrf.mxu0
        %v850 = vadd.f32 %v768, %v849
        %851 = vmatmul.bf16.gmra.mxu0 %v747
        %v852 = vpop.f32.mrf.mxu0
        %v853 = vadd.f32 %v768, %v852
        %v854 = vpop.f32.mrf.mxu0
        %v855 = vadd.f32 %v768, %v854
        %856 = vmatmul.bf16.gmra.mxu0 %v748
        %v857 = vpop.f32.mrf.mxu0
        %v858 = vadd.f32 %v768, %v857
        %v859 = vpop.f32.mrf.mxu0
        %v860 = vadd.f32 %v768, %v859
        %861 = vmatmul.bf16.gmra.mxu0 %v749
        %v862 = vpop.f32.mrf.mxu0
        %v863 = vadd.f32 %v768, %v862
        %v864 = vpop.f32.mrf.mxu0
        %v865 = vadd.f32 %v768, %v864
        %866 = vdwg.mxu0
        %v867 = vmax.f32 %v828, 0.0
        %v868 = vmax.f32 %v830, 0.0
        %v869 = vmax.f32 %v833, 0.0
        %v870 = vmax.f32 %v835, 0.0
        %v871 = vmax.f32 %v838, 0.0
        %v872 = vmax.f32 %v840, 0.0
        %v873 = vmax.f32 %v843, 0.0
        %v874 = vmax.f32 %v845, 0.0
        %v875 = vmax.f32 %v848, 0.0
        %v876 = vmax.f32 %v850, 0.0
        %v877 = vmax.f32 %v853, 0.0
        %v878 = vmax.f32 %v855, 0.0
        %v879 = vmax.f32 %v858, 0.0
        %v880 = vmax.f32 %v860, 0.0
        %v881 = vmax.f32 %v863, 0.0
        %v882 = vmax.f32 %v865, 0.0
        %v883 = vld [vmem:[%s6] sm:$0x1]
        %v884 = vpack.c.bf16 %v868, %v867
        %v885 = vpack.c.bf16 %v870, %v869
        %v886 = vpack.c.bf16 %v872, %v871
        %v887 = vpack.c.bf16 %v874, %v873
        %v888 = vpack.c.bf16 %v876, %v875
        %v889 = vpack.c.bf16 %v878, %v877
        %v890 = vpack.c.bf16 %v880, %v879
        %v891 = vpack.c.bf16 %v882, %v881
        %v892 = vld [vmem:[#allocation2] sm:$0x1]
        %894 = vset.pattern.permute.xlu0 0
        %895 = vperm.xlu0 %894, %v892
        %v896 = vpop.permute.xlu0 %895
        %v898 = vperm.slane %v896, 0
        %899 = vmatpush.bf16.xpose.msra.mxu0 %v891
        %900 = vmatpush.bf16.xpose.msra.mxu0 %v890
        %901 = vmatpush.bf16.xpose.msra.mxu0 %v889
        %902 = vmatpush.bf16.xpose.msra.mxu0 %v888
        %903 = vmatpush.bf16.xpose.msra.mxu0 %v887
        %904 = vmatpush.bf16.xpose.msra.mxu0 %v886
        %905 = vmatpush.bf16.xpose.msra.mxu0 %v885
        %906 = vmatpush.bf16.xpose.msra.mxu0 %v884
        %907 = vmatmul.bf16.gmra.mxu0 %v883
        %v908 = vpop.f32.mrf.mxu0
        %v909 = vadd.f32 %v898, %v908
        %v910 = vpop.f32.mrf.mxu0
        %911 = vdwg.mxu0
        %v912 = vxor.u32 %v909, 2147483648
        %v913 = vmul.f32 %v912, 1.442695
        %v914 = vpow.pop %v913
        %v915 = vadd.f32 %v914, 1.0
        %v916 = vrcp.pop %v915
        %v917 = vmul.f32 %v915, %v916
        %v918 = vsub.f32 1.0, %v917
        %v919 = vmul.f32 %v916, %v918
        %v920 = vadd.f32 %v916, %v919
        %vm921 = vweird.f32 %v915
        %vm922 = vweird.f32 %v916
        %vm923 = vmor %vm921, %vm922
        %v924 = vsel %vm923, %v916, %v920
        %v925 = vand.u32 2147483647, %v915
        %vm926 = vcmp.eq.f32.partialorder %v925, 8.507059e+37
        %v927 = vand.u32 %v915, 2147483648
        %v928 = vor.u32 1.1754944e-38, %v927
        %v929 = vsel %vm926, %v928, %v924
        %v930 = vmul.f32 1.0, %v929
        %931 = vst [vmem:[%s300] sm:$0x1] %v930
        %s932 = sand.u32 %s205, 1
        %s933 = scalar_lea.sflag [#allocation4], %s932
        %s934 = sand.u32 %s205, 1
        %s935 = scalar_lea.vmem [#allocation3], %s934
        // Predicated region
        $region53: #{tpu_custom_call.1} parent=51 // pred_check
          %p936 = pneg %p215
        $region54: #{tpu_custom_call.1} parent=51 // pred_check_branch
          %938 = sbr.rel (%p936) target = $region56
        $region55: #{tpu_custom_call.1} parent=51 // pred_region
          %940 = vsyncadd %s933, 0
          %s941 = scalar_lea.hbm %s8, %s24
          %s943 = sshll.u32 %s935, 4
          %s944 = int_to_ptr.vmem [resolvable:$true] %s943
          %s945 = sshll.u32 %s941, 4
          %s946 = int_to_ptr.hbm [resolvable:$true] %s945
          %948 = dma.vmem_to_hbm [thread:$0]  %s944, 16, %s946, %s933
        $region56: #{tpu_custom_call.1} parent=51 // pred_fallthru
          _
      $region52: #{tpu_custom_call.1} parent=5 // pred_fallthru
        _
      %p949 = scmp.le.s32.totalorder 2, %s19
      // Predicated region
      $region57: #{tpu_custom_call.1} parent=5 // pred_check
        %p950 = pneg %p949
      $region58: #{tpu_custom_call.1} parent=5 // pred_check_branch
        %952 = sbr.rel (%p950) target = $region60
      $region59: #{tpu_custom_call.1} parent=5 // pred_region
        %s953 = ssub.s32 %s19, 2
        // Predicated region
        $region61: #{tpu_custom_call.1} parent=59 // pred_check
          %p954 = pneg %p221
        $region62: #{tpu_custom_call.1} parent=59 // pred_check_branch
          %956 = sbr.rel (%p954) target = $region64
        $region63: #{tpu_custom_call.1} parent=59 // pred_region
          %s957 = sand.u32 %s206, 1
          %s958 = scalar_lea.sflag [#allocation4], %s957
          %s959 = sand.u32 %s206, 1
          %s960 = scalar_lea.vmem [#allocation3], %s959
          %962 = dma.done %s958, 16
        $region64: #{tpu_custom_call.1} parent=59 // pred_fallthru
          _
      $region60: #{tpu_custom_call.1} parent=5 // pred_fallthru
        _
    $region6: #{tpu_custom_call.1} parent=1 // loop_footer
      %s23 = sadd.s32 1, %s19
    $region7: #{tpu_custom_call.1} parent=1 // loop_footer_branch
      %18 = sbr.rel target = $region3
    $region8: #{tpu_custom_call.1} parent=1 // loop_exit
      _
    %963 = vsyncpa [#allocation4], 1
    %s964 = scalar_lea.sflag [#allocation4], 1
    %965 = vsyncpa %s964, 1

</llo_original>
